<compile_context>
chip_gen: v7x
topology: tpu7x:2x2x1
jax: 0.10.0
libtpu: 0.0.40
codegen_flags: <defaults>
</compile_context>

<pallas_src>
import math
from functools import lru_cache

import jax
import jax.numpy as jnp
import numpy as np
from jax.experimental import pallas as pl
from jax.experimental.pallas import tpu as pltpu


def _taylor_kernel(x_ref, b1_ref, b2_ref, c_ref, o_ref):
    # x/b1/b2 are in the input dtype (bf16 stays bf16 -> single-pass MXU);
    # accumulation and the scale multiply are f32, single downcast at the store.
    x = x_ref[...]
    ag = jnp.dot(x, b1_ref[...], preferred_element_type=jnp.float32) + c_ref[0:1, :]
    bg = jnp.dot(x, b2_ref[...], preferred_element_type=jnp.float32) + c_ref[1:2, :]
    o_ref[...] = (ag * bg * c_ref[2:3, :]).astype(o_ref.dtype)


@lru_cache(maxsize=None)
def _taylor_constants(head_dim: int, b_dtype_name: str):
    """0/1 selection matrices B1/B2 (input dtype) and f32 (3,P) [r1; r2; scale]."""
    D = head_dim
    T = D * (D - 1) // 2
    P = 1 + 2 * D + T
    rd = math.sqrt(D)
    rrd = math.sqrt(rd)
    sqrt2 = math.sqrt(2.0)

    B1 = np.zeros((D, P), np.float32)
    B2 = np.zeros((D, P), np.float32)
    consts = np.zeros((3, P), np.float32)       # rows: r1, r2, scale

    j = np.arange(D)
    # column 0: constant 1
    consts[0, 0] = 1.0
    consts[1, 0] = 1.0
    consts[2, 0] = 1.0
    # columns 1..D: x_j / rrd
    consts[0, 1 + j] = 1.0
    B2[j, 1 + j] = 1.0
    consts[2, 1 + j] = 1.0 / rrd
    # columns D+1..2D: x_j^2 / (rd * sqrt(2))
    B1[j, 1 + D + j] = 1.0
    B2[j, 1 + D + j] = 1.0
    consts[2, 1 + D + j] = 1.0 / (rd * sqrt2)
    # last T columns: x_i * x_j / rd, i < j, row-major (torch.triu_indices order)
    if T:
        iu0, iu1 = np.triu_indices(D, k=1)
        t = np.arange(T)
        B1[iu0, 1 + 2 * D + t] = 1.0
        B2[iu1, 1 + 2 * D + t] = 1.0
        consts[2, 1 + 2 * D + t] = 1.0 / rd

    dt = jnp.dtype(b_dtype_name)
    return (jnp.asarray(B1, dtype=dt), jnp.asarray(B2, dtype=dt),
            jnp.asarray(consts), P)


def _vmem_budget():
    """(vmem_limit_bytes, tile budget) sized against the current chip."""
    try:
        cap = int(pltpu.get_tpu_info().vmem_capacity_bytes)
    except Exception:
        cap = 64 * 1024 * 1024              # assume the smallest (v7x) if unknown
    limit = max(16 << 20, min(cap - (8 << 20), 100 << 20))
    return limit, int(limit * 0.8)


def _choose_tiles(M, D, P, x_it, out_it, b_it, budget):
    # Tile the feature (P) axis only when it is large, to bound the f32
    # intermediates and the double-buffered output block for big head_dim.
    tp = 2048 if P > 2048 else P
    n_p = pl.cdiv(P, tp)

    fixed = 2 * (2 * D * tp * b_it) + 2 * (3 * tp * 4)       # B1/B2 + consts (double-buffered)
    per_row = 2 * D * x_it + 2 * tp * out_it + 3 * tp * 4    # x + out (double-buffered) + f32 temps
    tm = max(1, budget - fixed) // per_row
    tm = int(max(16, min((tm // 16) * 16, 4096)))
    tm = min(tm, ((M + 15) // 16) * 16)
    # keep >= 4 total grid steps (>= 2 per TensorCore on v7x) when M allows
    need_m = max(1, -(-4 // n_p))
    if M >= need_m * 32:
        tm = min(tm, max(16, ((M // need_m) // 16) * 16))
    return tm, tp


def taylor_feature_map(x):
    """x: (..., head_dim) -> (..., 1 + 2*head_dim + head_dim*(head_dim-1)//2)."""
    *lead, D = x.shape
    B1, B2, consts, P = _taylor_constants(D, jnp.dtype(x.dtype).name)

    M = int(np.prod(lead)) if lead else 1
    x2d = x.reshape(M, D)

    x_it = jnp.dtype(x.dtype).itemsize
    limit, budget = _vmem_budget()
    tm, tp = _choose_tiles(M, D, P, x_it, x_it, x_it, budget)

    grid = (pl.cdiv(M, tm), pl.cdiv(P, tp))

    cost = pl.CostEstimate(
        flops=4 * M * D * P + 3 * M * P,
        transcendentals=0,
        bytes_accessed=M * D * x_it + M * P * x_it + 2 * D * P * x_it + 3 * P * 4,
    )

    out = pl.pallas_call(
        _taylor_kernel,
        out_shape=jax.ShapeDtypeStruct((M, P), x.dtype),
        grid_spec=pltpu.PrefetchScalarGridSpec(
            num_scalar_prefetch=0,
            grid=grid,
            in_specs=[
                pl.BlockSpec((tm, D), lambda i, j: (i, 0)),   # x (constant along j)
                pl.BlockSpec((D, tp), lambda i, j: (0, j)),   # B1
                pl.BlockSpec((D, tp), lambda i, j: (0, j)),   # B2
                pl.BlockSpec((3, tp), lambda i, j: (0, j)),   # [r1; r2; scale]
            ],
            out_specs=pl.BlockSpec((tm, tp), lambda i, j: (i, j)),
        ),
        compiler_params=pltpu.CompilerParams(
            dimension_semantics=("parallel", "parallel"),
            vmem_limit_bytes=limit,
        ),
        cost_estimate=cost,
    )(x2d, B1, B2, consts)

    return out.reshape(*lead, P)


def _reference(x):
    """Pure-JAX (f32) port of TaylorFeatureMap.forward."""
    D = x.shape[-1]
    rd = math.sqrt(D)
    rrd = math.sqrt(rd)
    sqrt2 = math.sqrt(2.0)
    xf = x.astype(jnp.float32)
    z = jnp.einsum('...i,...j->...ij', xf, xf)
    iu0, iu1 = np.triu_indices(D, k=1)
    diag = np.arange(D)
    x2_1 = z[..., iu0, iu1]
    x2_2 = z[..., diag, diag]
    ones = jnp.ones_like(xf[..., 0:1])
    return jnp.concatenate(
        [ones, xf / rrd, x2_2 / (rd * sqrt2), x2_1 / rd], axis=-1)


if __name__ == "__main__":
    # 1) small baseline shape (batch, heads, seq, head_dim), f32
    x = jax.random.normal(jax.random.PRNGKey(0), (2, 4, 16, 16), jnp.float32)
    out = jax.block_until_ready(taylor_feature_map(x))
    P = 1 + 2 * 16 + 16 * 15 // 2
    assert out.shape == (2, 4, 16, P)
    np.testing.assert_allclose(np.asarray(out), np.asarray(_reference(x)),
                               rtol=1e-5, atol=1e-5)

    # 2) larger head_dim -> exercises feature-axis (P) tiling and ragged blocks
    x64 = jax.random.normal(jax.random.PRNGKey(1), (2, 2, 8, 64), jnp.float32)
    out64 = jax.block_until_ready(taylor_feature_map(x64))
    np.testing.assert_allclose(np.asarray(out64), np.asarray(_reference(x64)),
                               rtol=1e-4, atol=1e-4)

    # 3) bf16 path (single-pass bf16 MXU matmuls, f32 accumulation + scaling)
    xbf = jax.random.normal(jax.random.PRNGKey(2), (1, 2, 21, 16), jnp.bfloat16)
    outbf = jax.block_until_ready(taylor_feature_map(xbf))
    np.testing.assert_allclose(np.asarray(outbf.astype(jnp.float32)),
                               np.asarray(_reference(xbf)), rtol=2e-2, atol=2e-2)

    print("KERNEL_OK")
</pallas_src>

<mosaic_0001>
module attributes {stable_mosaic.version = 11 : i64} {
  func.func @_taylor_kernel(%arg0: i32, %arg1: i32, %arg2: memref<32x16xf32, #tpu.memory_space<vmem>>, %arg3: memref<16x153xf32, #tpu.memory_space<vmem>>, %arg4: memref<16x153xf32, #tpu.memory_space<vmem>>, %arg5: memref<3x153xf32, #tpu.memory_space<vmem>>, %arg6: memref<32x153xf32, #tpu.memory_space<vmem>>) attributes {dimension_semantics = [#tpu.dimension_semantics<parallel>, #tpu.dimension_semantics<parallel>], iteration_bounds = array<i64: 4, 1>, scalar_prefetch = 0 : i64, scratch_operands = 0 : i64, tpu.core_type = #tpu.core_type<tc>, window_params = [{transform_indices = @transform_0, window_bounds = array<i64: 32, 16>}, {transform_indices = @transform_1, window_bounds = array<i64: 16, 153>}, {transform_indices = @transform_2, window_bounds = array<i64: 16, 153>}, {transform_indices = @transform_3, window_bounds = array<i64: 3, 153>}, {transform_indices = @transform_4, window_bounds = array<i64: 32, 153>}]} {
    %c0 = arith.constant 0 : index
    %c0_0 = arith.constant 0 : index
    %0 = vector.load %arg2[%c0, %c0_0] : memref<32x16xf32, #tpu.memory_space<vmem>>, vector<32x16xf32>
    %c0_1 = arith.constant 0 : index
    %c0_2 = arith.constant 0 : index
    %1 = vector.load %arg3[%c0_1, %c0_2] : memref<16x153xf32, #tpu.memory_space<vmem>>, vector<16x153xf32>
    %cst = arith.constant dense<0.000000e+00> : vector<32x153xf32>
    %2 = tpu.matmul %0, %1, %cst {dimension_numbers = #tpu.dot_dimension_numbers<[1], [0], [0], [1], [0, 0, 1, 1], [], []>} : vector<32x16xf32>, vector<16x153xf32>, vector<32x153xf32> -> vector<32x153xf32>
    %c0_3 = arith.constant 0 : index
    %c0_4 = arith.constant 0 : index
    %3 = vector.load %arg5[%c0_3, %c0_4] : memref<3x153xf32, #tpu.memory_space<vmem>>, vector<1x153xf32>
    %4 = vector.broadcast %3 : vector<1x153xf32> to vector<32x153xf32>
    %5 = arith.addf %2, %4 : vector<32x153xf32>
    %c0_5 = arith.constant 0 : index
    %c0_6 = arith.constant 0 : index
    %6 = vector.load %arg4[%c0_5, %c0_6] : memref<16x153xf32, #tpu.memory_space<vmem>>, vector<16x153xf32>
    %cst_7 = arith.constant dense<0.000000e+00> : vector<32x153xf32>
    %7 = tpu.matmul %0, %6, %cst_7 {dimension_numbers = #tpu.dot_dimension_numbers<[1], [0], [0], [1], [0, 0, 1, 1], [], []>} : vector<32x16xf32>, vector<16x153xf32>, vector<32x153xf32> -> vector<32x153xf32>
    %c1 = arith.constant 1 : index
    %c0_8 = arith.constant 0 : index
    %8 = vector.load %arg5[%c1, %c0_8] : memref<3x153xf32, #tpu.memory_space<vmem>>, vector<1x153xf32>
    %9 = vector.broadcast %8 : vector<1x153xf32> to vector<32x153xf32>
    %10 = arith.addf %7, %9 : vector<32x153xf32>
    %11 = arith.mulf %5, %10 : vector<32x153xf32>
    %c2 = arith.constant 2 : index
    %c0_9 = arith.constant 0 : index
    %12 = vector.load %arg5[%c2, %c0_9] : memref<3x153xf32, #tpu.memory_space<vmem>>, vector<1x153xf32>
    %13 = vector.broadcast %12 : vector<1x153xf32> to vector<32x153xf32>
    %14 = arith.mulf %11, %13 : vector<32x153xf32>
    %c0_10 = arith.constant 0 : index
    %c0_11 = arith.constant 0 : index
    %15 = vector.load %arg6[%c0_10, %c0_11] : memref<32x153xf32, #tpu.memory_space<vmem>>, vector<32x153xf32>
    tpu.vector_store %arg6[%c0_10, %c0_11], %14 {strides = array<i32>} : memref<32x153xf32, #tpu.memory_space<vmem>>, vector<32x153xf32>,
    return
  }
  func.func @transform_0(%arg0: i32, %arg1: i32) -> (i32, i32) {
    %c0_i32 = arith.constant 0 : i32
    %c0_i32_0 = arith.constant 0 : i32
    return %arg0, %c0_i32 : i32, i32
  }
  func.func @transform_1(%arg0: i32, %arg1: i32) -> (i32, i32) {
    %c0_i32 = arith.constant 0 : i32
    %c0_i32_0 = arith.constant 0 : i32
    return %c0_i32, %arg1 : i32, i32
  }
  func.func @transform_2(%arg0: i32, %arg1: i32) -> (i32, i32) {
    %c0_i32 = arith.constant 0 : i32
    %c0_i32_0 = arith.constant 0 : i32
    return %c0_i32, %arg1 : i32, i32
  }
  func.func @transform_3(%arg0: i32, %arg1: i32) -> (i32, i32) {
    %c0_i32 = arith.constant 0 : i32
    %c0_i32_0 = arith.constant 0 : i32
    return %c0_i32, %arg1 : i32, i32
  }
  func.func @transform_4(%arg0: i32, %arg1: i32) -> (i32, i32) {
    %c0_i32 = arith.constant 0 : i32
    return %arg0, %arg1 : i32, i32
  }
}

</mosaic_0001>

<llo_original>
// kernel: tpu_custom_call.1
$region0: #{tpu_custom_call.1}
  #allocation0 [shape = 'u32[]', space=smem, size = 0x4, offset = 0x4, fixed_abs, tag = 'smem constant byte address 0x4 - core index']
  #allocation1 [shape = 'u32[144,128]{1,0:T(1,128)}', space=vmem, size = 0x12000, scoped, tag = 'internal scratch']
  %s0 = inlined_call_operand.vmem [shape: f32[128,16], index: 0, kind: input, shape index: {}]
  %s1 = inlined_call_operand.vmem [shape: f32[16,153], index: 1, kind: input, shape index: {}]
  %s2 = inlined_call_operand.vmem [shape: f32[16,153], index: 2, kind: input, shape index: {}]
  %s3 = inlined_call_operand.vmem [shape: f32[3,153], index: 3, kind: input, shape index: {}]
  %s4 = inlined_call_operand.vmem [shape: f32[128,153], index: 4, kind: output, shape index: {}]
  %s5 = sld [smem:[#allocation0]]
  $region49: #{tpu_custom_call.1} parent=0
    _
  %s7 = ssub.s32 1, %s5
  %s8 = scalar_select 0, %s7, %s5
  loop: start=0, step=1, limit=6
  $region2: #{tpu_custom_call.1} parent=0 // loop_pre_header
    _
  $region3: #{tpu_custom_call.1} parent=0 // loop_header
    %s10 = sphi 0, %s14
    %p11 = scmp.ge.s32.totalorder %s10, 6
    %s17 = sphi 0, %s29
    %s18 = sphi 0, %s25
    %s19 = sphi 0, %s17
    %s20 = sphi 0, %s18
    %s21 = sphi 0, %s19
    %s22 = sphi 0, %s20
    %s32 = sphi 0, %s34
    %s35 = sphi 0, %s32
    %s36 = sphi 0, %s35
    %s52 = sphi 0, %s36
    %s58 = sphi 0, %s60
    %s61 = sphi 0, %s58
    %s62 = sphi 0, %s61
    %s78 = sphi 0, %s62
    %s84 = sphi 0, %s86
    %s87 = sphi 0, %s84
    %s88 = sphi 0, %s87
    %s104 = sphi 0, %s88
    %s110 = sphi 0, %s112
    %s113 = sphi 0, %s110
    %s114 = sphi 0, %s113
    %s130 = sphi 0, %s114
    %s138 = sphi 0, %s140
    %s141 = sphi 0, %s138
    %s142 = sphi 0, %s141
    %s158 = sphi 0, %s142
  $region4: #{tpu_custom_call.1} parent=0 // loop_header_branch
    %13 = sbr.rel (%p11) target = $region8
  $region5: #{tpu_custom_call.1} parent=0 // loop_body
    %s15 = ssub.s32 %s10, 1
    %s16 = ssub.s32 %s10, 2
    %s23 = sadd.s32 1, %s18
    %p24 = scmp.ge.s32.totalorder %s23, 1
    %s25 = scalar_select %p24, 0, %s23
    %s26 = sadd.s32 1, %s17
    %s27 = scalar_select %p24, %s26, %s17
    %p28 = scmp.ge.s32.totalorder %s27, 4
    %s29 = scalar_select %p28, 0, %s27
    %s30 = ssub.s32 %s17, %s29
    %p31 = scmp.eq.s32.totalorder %s30, 0
    %s33 = sadd.s32 %s32, 1
    %s34 = scalar_select %p31, %s32, %s33
    %p37 = pneg %p31
    %p38 = scmp.eq.s32.totalorder %s10, 3
    %p39 = por %p37, %p38
    %p40 = scmp.ne.s32.totalorder %s32, %s35
    %p41 = scmp.eq.s32.totalorder %s10, 0
    %p42 = por %p40, %p41
    %p43 = scmp.ne.s32.totalorder %s32, %s35
    %p44 = scmp.eq.s32.totalorder %s15, 3
    %p45 = por %p43, %p44
    %p46 = scmp.ne.s32.totalorder %s35, %s36
    %p47 = scmp.eq.s32.totalorder %s15, 0
    %p48 = por %p46, %p47
    %p49 = scmp.ne.s32.totalorder %s35, %s36
    %p50 = scmp.eq.s32.totalorder %s16, 3
    %p51 = por %p49, %p50
    %p53 = scmp.ne.s32.totalorder %s36, %s52
    %p54 = scmp.eq.s32.totalorder %s16, 0
    %p55 = por %p53, %p54
    %s56 = ssub.s32 %s18, %s25
    %p57 = scmp.eq.s32.totalorder %s56, 0
    %s59 = sadd.s32 %s58, 1
    %s60 = scalar_select %p57, %s58, %s59
    %p63 = pneg %p57
    %p64 = scmp.eq.s32.totalorder %s10, 3
    %p65 = por %p63, %p64
    %p66 = scmp.ne.s32.totalorder %s58, %s61
    %p67 = scmp.eq.s32.totalorder %s10, 0
    %p68 = por %p66, %p67
    %p69 = scmp.ne.s32.totalorder %s58, %s61
    %p70 = scmp.eq.s32.totalorder %s15, 3
    %p71 = por %p69, %p70
    %p72 = scmp.ne.s32.totalorder %s61, %s62
    %p73 = scmp.eq.s32.totalorder %s15, 0
    %p74 = por %p72, %p73
    %p75 = scmp.ne.s32.totalorder %s61, %s62
    %p76 = scmp.eq.s32.totalorder %s16, 3
    %p77 = por %p75, %p76
    %p79 = scmp.ne.s32.totalorder %s62, %s78
    %p80 = scmp.eq.s32.totalorder %s16, 0
    %p81 = por %p79, %p80
    %s82 = ssub.s32 %s18, %s25
    %p83 = scmp.eq.s32.totalorder %s82, 0
    %s85 = sadd.s32 %s84, 1
    %s86 = scalar_select %p83, %s84, %s85
    %p89 = pneg %p83
    %p90 = scmp.eq.s32.totalorder %s10, 3
    %p91 = por %p89, %p90
    %p92 = scmp.ne.s32.totalorder %s84, %s87
    %p93 = scmp.eq.s32.totalorder %s10, 0
    %p94 = por %p92, %p93
    %p95 = scmp.ne.s32.totalorder %s84, %s87
    %p96 = scmp.eq.s32.totalorder %s15, 3
    %p97 = por %p95, %p96
    %p98 = scmp.ne.s32.totalorder %s87, %s88
    %p99 = scmp.eq.s32.totalorder %s15, 0
    %p100 = por %p98, %p99
    %p101 = scmp.ne.s32.totalorder %s87, %s88
    %p102 = scmp.eq.s32.totalorder %s16, 3
    %p103 = por %p101, %p102
    %p105 = scmp.ne.s32.totalorder %s88, %s104
    %p106 = scmp.eq.s32.totalorder %s16, 0
    %p107 = por %p105, %p106
    %s108 = ssub.s32 %s18, %s25
    %p109 = scmp.eq.s32.totalorder %s108, 0
    %s111 = sadd.s32 %s110, 1
    %s112 = scalar_select %p109, %s110, %s111
    %p115 = pneg %p109
    %p116 = scmp.eq.s32.totalorder %s10, 3
    %p117 = por %p115, %p116
    %p118 = scmp.ne.s32.totalorder %s110, %s113
    %p119 = scmp.eq.s32.totalorder %s10, 0
    %p120 = por %p118, %p119
    %p121 = scmp.ne.s32.totalorder %s110, %s113
    %p122 = scmp.eq.s32.totalorder %s15, 3
    %p123 = por %p121, %p122
    %p124 = scmp.ne.s32.totalorder %s113, %s114
    %p125 = scmp.eq.s32.totalorder %s15, 0
    %p126 = por %p124, %p125
    %p127 = scmp.ne.s32.totalorder %s113, %s114
    %p128 = scmp.eq.s32.totalorder %s16, 3
    %p129 = por %p127, %p128
    %p131 = scmp.ne.s32.totalorder %s114, %s130
    %p132 = scmp.eq.s32.totalorder %s16, 0
    %p133 = por %p131, %p132
    %s134 = ssub.s32 %s17, %s29
    %s135 = ssub.s32 %s18, %s25
    %s136 = sor.u32 %s134, %s135
    %p137 = scmp.eq.s32.totalorder %s136, 0
    %s139 = sadd.s32 %s138, 1
    %s140 = scalar_select %p137, %s138, %s139
    %p143 = pneg %p137
    %p144 = scmp.eq.s32.totalorder %s10, 3
    %p145 = por %p143, %p144
    %p146 = scmp.ne.s32.totalorder %s138, %s141
    %p147 = scmp.eq.s32.totalorder %s10, 0
    %p148 = por %p146, %p147
    %p149 = scmp.ne.s32.totalorder %s138, %s141
    %p150 = scmp.eq.s32.totalorder %s15, 3
    %p151 = por %p149, %p150
    %p152 = scmp.ne.s32.totalorder %s141, %s142
    %p153 = scmp.eq.s32.totalorder %s15, 0
    %p154 = por %p152, %p153
    %p155 = scmp.ne.s32.totalorder %s141, %s142
    %p156 = scmp.eq.s32.totalorder %s16, 3
    %p157 = por %p155, %p156
    %p159 = scmp.ne.s32.totalorder %s142, %s158
    %p160 = scmp.eq.s32.totalorder %s16, 0
    %p161 = por %p159, %p160
    %p162 = scmp.le.s32.totalorder 1, %s10
    %p163 = scmp.lt.s32.totalorder %s10, 5
    %p164 = pnand %p162, %p163
    %p165 = pneg %p164
    // Predicated region
    $region9: #{tpu_custom_call.1} parent=5 // pred_check
      _
    $region10: #{tpu_custom_call.1} parent=5 // pred_check_branch
      %167 = sbr.rel (%p164) target = $region12
    $region11: #{tpu_custom_call.1} parent=5 // pred_region
      %s168 = ssub.s32 %s10, 1
      // Predicated region
      $region13: #{tpu_custom_call.1} parent=11 // pred_check
        %p169 = pneg %p74
      $region14: #{tpu_custom_call.1} parent=11 // pred_check_branch
        %171 = sbr.rel (%p169) target = $region16
      $region15: #{tpu_custom_call.1} parent=11 // pred_region
        %s172 = smul.u32 2, %s20
        %p173 = scmp.lt.s32.totalorder %s172, 1
        %s174 = scalar_select %p173, %s172, 1
        %s175 = smul.addr %s174, 8
        %s176 = scalar_lea.vmem %s1, %s175
        %s177 = smul.u32 2, %s20
      $region16: #{tpu_custom_call.1} parent=11 // pred_fallthru
        _
      // Predicated region
      $region17: #{tpu_custom_call.1} parent=11 // pred_check
        %p178 = pneg %p100
      $region18: #{tpu_custom_call.1} parent=11 // pred_check_branch
        %180 = sbr.rel (%p178) target = $region20
      $region19: #{tpu_custom_call.1} parent=11 // pred_region
        %s181 = smul.u32 2, %s20
        %p182 = scmp.lt.s32.totalorder %s181, 1
        %s183 = scalar_select %p182, %s181, 1
        %s184 = smul.addr %s183, 8
        %s185 = scalar_lea.vmem %s2, %s184
        %s186 = smul.u32 2, %s20
      $region20: #{tpu_custom_call.1} parent=11 // pred_fallthru
        _
      // Predicated region
      $region21: #{tpu_custom_call.1} parent=11 // pred_check
        %p187 = pneg %p126
      $region22: #{tpu_custom_call.1} parent=11 // pred_check_branch
        %189 = sbr.rel (%p187) target = $region24
      $region23: #{tpu_custom_call.1} parent=11 // pred_region
        %s190 = smul.u32 2, %s20
        %p191 = scmp.lt.s32.totalorder %s190, 1
        %s192 = scalar_select %p191, %s190, 1
        %s193 = smul.addr %s192, 4
        %s194 = scalar_lea.vmem %s3, %s193
        %s195 = smul.u32 2, %s20
      $region24: #{tpu_custom_call.1} parent=11 // pred_fallthru
        _
    $region12: #{tpu_custom_call.1} parent=5 // pred_fallthru
      _
    %p196 = scmp.lt.s32.totalorder %s10, 4
    // Predicated region
    $region25: #{tpu_custom_call.1} parent=5 // pred_check
      %p197 = pneg %p196
    $region26: #{tpu_custom_call.1} parent=5 // pred_check_branch
      %199 = sbr.rel (%p197) target = $region28
    $region27: #{tpu_custom_call.1} parent=5 // pred_region
      // Predicated region
      $region29: #{tpu_custom_call.1} parent=27 // pred_check
        %p200 = pneg %p42
      $region30: #{tpu_custom_call.1} parent=27 // pred_check_branch
        %202 = sbr.rel (%p200) target = $region32
      $region31: #{tpu_custom_call.1} parent=27 // pred_region
        %s203 = smul.u32 4, %s17
        %p204 = scmp.lt.s32.totalorder %s203, 15
        %s205 = scalar_select %p204, %s203, 15
        %s206 = smul.addr %s205, 8
        %s207 = scalar_lea.vmem %s0, %s206
        %s208 = smul.u32 4, %s17
      $region32: #{tpu_custom_call.1} parent=27 // pred_fallthru
        _
    $region28: #{tpu_custom_call.1} parent=5 // pred_fallthru
      _
    %p209 = scmp.le.s32.totalorder 1, %s10
    %p210 = scmp.lt.s32.totalorder %s10, 5
    %p211 = pnand %p209, %p210
    %p212 = pneg %p211
    // Predicated region
    $region33: #{tpu_custom_call.1} parent=5 // pred_check
      _
    $region34: #{tpu_custom_call.1} parent=5 // pred_check_branch
      %214 = sbr.rel (%p211) target = $region36
    $region35: #{tpu_custom_call.1} parent=5 // pred_region
      %s215 = ssub.s32 %s10, 1
      %s216 = smul.u32 4, %s19
      %p217 = scmp.lt.s32.totalorder %s216, 15
      %s218 = scalar_select %p217, %s216, 15
      %s219 = smul.addr %s218, 8
      %s220 = scalar_lea.vmem %s0, %s219
      %p221 = pneg %p48
      %p222 = pneg %p45
      %s223 = smul.u32 2, %s20
      %p224 = scmp.lt.s32.totalorder %s223, 1
      %s225 = scalar_select %p224, %s223, 1
      %s226 = smul.addr %s225, 8
      %s227 = scalar_lea.vmem %s1, %s226
      %p228 = pneg %p74
      %p229 = pneg %p71
      %s230 = smul.u32 2, %s20
      %p231 = scmp.lt.s32.totalorder %s230, 1
      %s232 = scalar_select %p231, %s230, 1
      %s233 = smul.addr %s232, 8
      %s234 = scalar_lea.vmem %s2, %s233
      %p235 = pneg %p100
      %p236 = pneg %p97
      %s237 = smul.u32 2, %s20
      %p238 = scmp.lt.s32.totalorder %s237, 1
      %s239 = scalar_select %p238, %s237, 1
      %s240 = smul.addr %s239, 4
      %s241 = scalar_lea.vmem %s3, %s240
      %p242 = pneg %p126
      %p243 = pneg %p123
      %p244 = pneg %p154
      %p245 = pneg %p151
      %s246 = smul.u32 4, %s19
      %s247 = smul.u32 2, %s20
      %p248 = scmp.lt.s32.totalorder %s246, 15
      %s249 = scalar_select %p248, %s246, 15
      %p250 = scmp.lt.s32.totalorder %s247, 1
      %s251 = scalar_select %p250, %s247, 1
      %s252 = smul.addr %s249, 2
      %s253 = sadd.s32 %s251, %s252
      %s254 = smul.addr %s253, 8
      %s255 = scalar_lea.vmem %s4, %s254
      %s256 = smul.u32 4, %s19
      %p257 = scmp.lt.s32.totalorder %s256, 15
      %s258 = scalar_select %p257, %s256, 15
      %s259 = smul.addr %s258, 8
      %s260 = scalar_lea.vmem %s0, %s259
      %s261 = smul.u32 4, %s19
      %s262 = smul.u32 2, %s20
      %p263 = scmp.lt.s32.totalorder %s262, 1
      %s264 = scalar_select %p263, %s262, 1
      %s265 = smul.addr %s264, 8
      %s266 = scalar_lea.vmem %s1, %s265
      %s267 = smul.u32 2, %s20
      %s268 = smul.u32 2, %s20
      %p269 = scmp.lt.s32.totalorder %s268, 1
      %s270 = scalar_select %p269, %s268, 1
      %s271 = smul.addr %s270, 8
      %s272 = scalar_lea.vmem %s2, %s271
      %s273 = smul.u32 2, %s20
      %s274 = smul.u32 2, %s20
      %p275 = scmp.lt.s32.totalorder %s274, 1
      %s276 = scalar_select %p275, %s274, 1
      %s277 = smul.addr %s276, 4
      %s278 = scalar_lea.vmem %s3, %s277
      %s279 = smul.u32 2, %s20
      %s280 = smul.u32 4, %s19
      %s281 = smul.u32 2, %s20
      %p282 = scmp.lt.s32.totalorder %s280, 15
      %s283 = scalar_select %p282, %s280, 15
      %p284 = scmp.lt.s32.totalorder %s281, 1
      %s285 = scalar_select %p284, %s281, 1
      %s286 = smul.addr %s283, 2
      %s287 = sadd.s32 %s285, %s286
      %s288 = smul.addr %s287, 8
      %s289 = scalar_lea.vmem %s4, %s288
      %s290 = smul.u32 4, %s19
      %s291 = smul.u32 2, %s20
      %v292 = vld [vmem:[%s260] sm:$0xff]
      %v293 = vld [vmem:[%s260 + $0x8] sm:$0xff]
      %v294 = vld [vmem:[%s260 + $0x10] sm:$0xff]
      %v295 = vld [vmem:[%s260 + $0x18] sm:$0xff]
      %v296 = vld [vmem:[%s266] sm:$0xff]
      %v297 = vld [vmem:[%s266 + $0x8] sm:$0xff]
      %v298 = vld [vmem:[%s266 + $0x10] sm:$0xff]
      %v299 = vld [vmem:[%s266 + $0x18] sm:$0xff]
      %v300 = vld [vmem:[%s278] ss:$4 sm:$0x3]
      %v302 = vlaneseq
      %v303 = vshrl.u32 %v302, 7
      %v304 = vsub.s32 0, %v303
      %v305 = vrot.slane %v300, %v304
      %v306 = vlaneseq
      %v307 = vshrl.u32 %v306, 7
      %v308 = vsub.s32 1, %v307
      %v309 = vrot.slane %v300, %v308
      %vm312 = vcmask 130048
      %v314 = vsel %vm312, %v292, 0
      %v317 = vsel %vm312, %v293, 0
      %v320 = vsel %vm312, %v294, 0
      %v323 = vsel %vm312, %v295, 0
      %325 = vmatprep.subr.mxu0 %v297
      %326 = vmatpush1.msra.mxu0 %v296
      %327 = vmatprep.subr.mxu0 %v299
      %328 = vmatpush1.msra.mxu0 %v298
      %329 = vmatprep.subr.mxu0 0.0
      %330 = vmatpush1.msra.mxu0 0.0
      %331 = vmatprep.subr.mxu0 0.0
      %332 = vmatpush1.msra.mxu0 0.0
      %333 = vmatprep.subr.mxu0 0.0
      %334 = vmatpush1.msra.mxu0 0.0
      %335 = vmatprep.subr.mxu0 0.0
      %336 = vmatpush1.msra.mxu0 0.0
      %337 = vmatprep.subr.mxu0 0.0
      %338 = vmatpush1.msra.mxu0 0.0
      %339 = vmatprep.subr.mxu0 0.0
      %340 = vmatpush1.msra.mxu0 0.0
      %341 = vmatprep.subr.mxu0 0.0
      %342 = vmatpush1.msra.mxu0 0.0
      %343 = vmatprep.subr.mxu0 0.0
      %344 = vmatpush1.msra.mxu0 0.0
      %345 = vmatprep.subr.mxu0 0.0
      %346 = vmatpush1.msra.mxu0 0.0
      %347 = vmatprep.subr.mxu0 0.0
      %348 = vmatpush1.msra.mxu0 0.0
      %349 = vmatprep.subr.mxu0 0.0
      %350 = vmatpush1.msra.mxu0 0.0
      %351 = vmatprep.subr.mxu0 0.0
      %352 = vmatpush1.msra.mxu0 0.0
      %353 = vmatprep.subr.mxu0 0.0
      %354 = vmatpush1.msra.mxu0 0.0
      %355 = vmatprep.subr.mxu0 0.0
      %356 = vmatpush1.msra.mxu0 0.0
      %357 = vmatprep.subr.mxu0 0.0
      %358 = vmatpush1.msra.mxu0 0.0
      %359 = vmatprep.subr.mxu0 0.0
      %360 = vmatpush1.msra.mxu0 0.0
      %361 = vmatprep.subr.mxu0 0.0
      %362 = vmatpush1.msra.mxu0 0.0
      %363 = vmatprep.subr.mxu0 0.0
      %364 = vmatpush1.msra.mxu0 0.0
      %365 = vmatprep.subr.mxu0 0.0
      %366 = vmatpush1.msra.mxu0 0.0
      %367 = vmatprep.subr.mxu0 0.0
      %368 = vmatpush1.msra.mxu0 0.0
      %369 = vmatprep.subr.mxu0 0.0
      %370 = vmatpush1.msra.mxu0 0.0
      %371 = vmatprep.subr.mxu0 0.0
      %372 = vmatpush1.msra.mxu0 0.0
      %373 = vmatprep.subr.mxu0 0.0
      %374 = vmatpush1.msra.mxu0 0.0
      %375 = vmatprep.subr.mxu0 0.0
      %376 = vmatpush1.msra.mxu0 0.0
      %377 = vmatprep.subr.mxu0 0.0
      %378 = vmatpush1.msra.mxu0 0.0
      %379 = vmatprep.subr.mxu0 0.0
      %380 = vmatpush1.msra.mxu0 0.0
      %381 = vmatprep.subr.mxu0 0.0
      %382 = vmatpush1.msra.mxu0 0.0
      %383 = vmatprep.subr.mxu0 0.0
      %384 = vmatpush1.msra.mxu0 0.0
      %385 = vmatprep.subr.mxu0 0.0
      %386 = vmatpush1.msra.mxu0 0.0
      %387 = vmatprep.subr.mxu0 0.0
      %388 = vmatpush1.msra.mxu0 0.0
      %389 = vmatprep.mubr.f32.mxu0 0.0
      %390 = vmatmul.mubr.f32.gmra.mrb[0].mxu0 %v314
      %v391 = vpop.f32.mrb[0].mxu0
      %v392 = vadd.f32 %v305, %v391
      %v393 = vpop.f32.mrb[0].mxu0
      %v394 = vadd.f32 %v309, %v393
      %395 = vmatprep.mubr.f32.mxu0 0.0
      %396 = vmatmul.mubr.f32.gmra.mrb[0].mxu0 %v317
      %v397 = vpop.f32.mrb[0].mxu0
      %v398 = vadd.f32 %v305, %v397
      %v399 = vpop.f32.mrb[0].mxu0
      %v400 = vadd.f32 %v309, %v399
      %401 = vmatprep.mubr.f32.mxu0 0.0
      %402 = vmatmul.mubr.f32.gmra.mrb[0].mxu0 %v320
      %v403 = vpop.f32.mrb[0].mxu0
      %v404 = vadd.f32 %v305, %v403
      %v405 = vpop.f32.mrb[0].mxu0
      %v406 = vadd.f32 %v309, %v405
      %407 = vmatprep.mubr.f32.mxu0 0.0
      %408 = vmatmul.mubr.f32.gmra.mrb[0].mxu0 %v323
      %v409 = vpop.f32.mrb[0].mxu0
      %v410 = vadd.f32 %v305, %v409
      %v411 = vpop.f32.mrb[0].mxu0
      %v412 = vadd.f32 %v309, %v411
      %413 = vdwg.mxu0
      %v414 = vld [vmem:[%s272] sm:$0xff]
      %v415 = vld [vmem:[%s272 + $0x8] sm:$0xff]
      %v416 = vld [vmem:[%s272 + $0x10] sm:$0xff]
      %v417 = vld [vmem:[%s272 + $0x18] sm:$0xff]
      %s418 = scalar_lea.vmem %s278, 1
      %v419 = vld [vmem:[%s418] ss:$4 sm:$0x3]
      %v421 = vlaneseq
      %v422 = vshrl.u32 %v421, 7
      %v423 = vsub.s32 0, %v422
      %v424 = vrot.slane %v419, %v423
      %v425 = vlaneseq
      %v426 = vshrl.u32 %v425, 7
      %v427 = vsub.s32 1, %v426
      %v428 = vrot.slane %v419, %v427
      %431 = vmatprep.subr.mxu0 %v415
      %432 = vmatpush1.msra.mxu0 %v414
      %433 = vmatprep.subr.mxu0 %v417
      %434 = vmatpush1.msra.mxu0 %v416
      %435 = vmatprep.subr.mxu0 0.0
      %436 = vmatpush1.msra.mxu0 0.0
      %437 = vmatprep.subr.mxu0 0.0
      %438 = vmatpush1.msra.mxu0 0.0
      %439 = vmatprep.subr.mxu0 0.0
      %440 = vmatpush1.msra.mxu0 0.0
      %441 = vmatprep.subr.mxu0 0.0
      %442 = vmatpush1.msra.mxu0 0.0
      %443 = vmatprep.subr.mxu0 0.0
      %444 = vmatpush1.msra.mxu0 0.0
      %445 = vmatprep.subr.mxu0 0.0
      %446 = vmatpush1.msra.mxu0 0.0
      %447 = vmatprep.subr.mxu0 0.0
      %448 = vmatpush1.msra.mxu0 0.0
      %449 = vmatprep.subr.mxu0 0.0
      %450 = vmatpush1.msra.mxu0 0.0
      %451 = vmatprep.subr.mxu0 0.0
      %452 = vmatpush1.msra.mxu0 0.0
      %453 = vmatprep.subr.mxu0 0.0
      %454 = vmatpush1.msra.mxu0 0.0
      %455 = vmatprep.subr.mxu0 0.0
      %456 = vmatpush1.msra.mxu0 0.0
      %457 = vmatprep.subr.mxu0 0.0
      %458 = vmatpush1.msra.mxu0 0.0
      %459 = vmatprep.subr.mxu0 0.0
      %460 = vmatpush1.msra.mxu0 0.0
      %461 = vmatprep.subr.mxu0 0.0
      %462 = vmatpush1.msra.mxu0 0.0
      %463 = vmatprep.subr.mxu0 0.0
      %464 = vmatpush1.msra.mxu0 0.0
      %465 = vmatprep.subr.mxu0 0.0
      %466 = vmatpush1.msra.mxu0 0.0
      %467 = vmatprep.subr.mxu0 0.0
      %468 = vmatpush1.msra.mxu0 0.0
      %469 = vmatprep.subr.mxu0 0.0
      %470 = vmatpush1.msra.mxu0 0.0
      %471 = vmatprep.subr.mxu0 0.0
      %472 = vmatpush1.msra.mxu0 0.0
      %473 = vmatprep.subr.mxu0 0.0
      %474 = vmatpush1.msra.mxu0 0.0
      %475 = vmatprep.subr.mxu0 0.0
      %476 = vmatpush1.msra.mxu0 0.0
      %477 = vmatprep.subr.mxu0 0.0
      %478 = vmatpush1.msra.mxu0 0.0
      %479 = vmatprep.subr.mxu0 0.0
      %480 = vmatpush1.msra.mxu0 0.0
      %481 = vmatprep.subr.mxu0 0.0
      %482 = vmatpush1.msra.mxu0 0.0
      %483 = vmatprep.subr.mxu0 0.0
      %484 = vmatpush1.msra.mxu0 0.0
      %485 = vmatprep.subr.mxu0 0.0
      %486 = vmatpush1.msra.mxu0 0.0
      %487 = vmatprep.subr.mxu0 0.0
      %488 = vmatpush1.msra.mxu0 0.0
      %489 = vmatprep.subr.mxu0 0.0
      %490 = vmatpush1.msra.mxu0 0.0
      %491 = vmatprep.subr.mxu0 0.0
      %492 = vmatpush1.msra.mxu0 0.0
      %493 = vmatprep.subr.mxu0 0.0
      %494 = vmatpush1.msra.mxu0 0.0
      %495 = vmatprep.mubr.f32.mxu0 0.0
      %496 = vmatmul.mubr.f32.gmra.mrb[0].mxu0 %v314
      %v497 = vpop.f32.mrb[0].mxu0
      %v498 = vadd.f32 %v424, %v497
      %v499 = vpop.f32.mrb[0].mxu0
      %v500 = vadd.f32 %v428, %v499
      %501 = vmatprep.mubr.f32.mxu0 0.0
      %502 = vmatmul.mubr.f32.gmra.mrb[0].mxu0 %v317
      %v503 = vpop.f32.mrb[0].mxu0
      %v504 = vadd.f32 %v424, %v503
      %v505 = vpop.f32.mrb[0].mxu0
      %v506 = vadd.f32 %v428, %v505
      %507 = vmatprep.mubr.f32.mxu0 0.0
      %508 = vmatmul.mubr.f32.gmra.mrb[0].mxu0 %v320
      %v509 = vpop.f32.mrb[0].mxu0
      %v510 = vadd.f32 %v424, %v509
      %v511 = vpop.f32.mrb[0].mxu0
      %v512 = vadd.f32 %v428, %v511
      %513 = vmatprep.mubr.f32.mxu0 0.0
      %514 = vmatmul.mubr.f32.gmra.mrb[0].mxu0 %v323
      %v515 = vpop.f32.mrb[0].mxu0
      %v516 = vadd.f32 %v424, %v515
      %v517 = vpop.f32.mrb[0].mxu0
      %v518 = vadd.f32 %v428, %v517
      %519 = vdwg.mxu0
      %v520 = vmul.f32 %v392, %v498
      %v521 = vmul.f32 %v394, %v500
      %v522 = vmul.f32 %v398, %v504
      %v523 = vmul.f32 %v400, %v506
      %v524 = vmul.f32 %v404, %v510
      %v525 = vmul.f32 %v406, %v512
      %v526 = vmul.f32 %v410, %v516
      %v527 = vmul.f32 %v412, %v518
      %s528 = scalar_lea.vmem %s278, 2
      %v529 = vld [vmem:[%s528] ss:$4 sm:$0x3]
      %v531 = vlaneseq
      %v532 = vshrl.u32 %v531, 7
      %v533 = vsub.s32 0, %v532
      %v534 = vrot.slane %v529, %v533
      %v535 = vlaneseq
      %v536 = vshrl.u32 %v535, 7
      %v537 = vsub.s32 1, %v536
      %v538 = vrot.slane %v529, %v537
      %v541 = vmul.f32 %v520, %v534
      %v542 = vmul.f32 %v521, %v538
      %v543 = vmul.f32 %v522, %v534
      %v544 = vmul.f32 %v523, %v538
      %v545 = vmul.f32 %v524, %v534
      %v546 = vmul.f32 %v525, %v538
      %v547 = vmul.f32 %v526, %v534
      %v548 = vmul.f32 %v527, %v538
      %549 = vst [vmem:[%s289] sm:$0xff] %v541
      %vm550 = vcmask 203776
      %551 = vst.msk [vmem:[%s289 + $0x8] sm:$0xff] %vm550, %v542
      %552 = vst [vmem:[%s289 + $0x10] sm:$0xff] %v543
      %553 = vst.msk [vmem:[%s289 + $0x18] sm:$0xff] %vm550, %v544
      %554 = vst [vmem:[%s289 + $0x20] sm:$0xff] %v545
      %555 = vst.msk [vmem:[%s289 + $0x28] sm:$0xff] %vm550, %v546
      %556 = vst [vmem:[%s289 + $0x30] sm:$0xff] %v547
      %557 = vst.msk [vmem:[%s289 + $0x38] sm:$0xff] %vm550, %v548
      %s558 = smul.u32 4, %s19
      %s559 = smul.u32 2, %s20
      %p560 = scmp.lt.s32.totalorder %s558, 15
      %s561 = scalar_select %p560, %s558, 15
      %p562 = scmp.lt.s32.totalorder %s559, 1
      %s563 = scalar_select %p562, %s559, 1
      %s564 = smul.addr %s561, 2
      %s565 = sadd.s32 %s563, %s564
      %s566 = smul.addr %s565, 8
      %s567 = scalar_lea.vmem %s4, %s566
      // Predicated region
      $region37: #{tpu_custom_call.1} parent=35 // pred_check
        %p568 = pneg %p151
      $region38: #{tpu_custom_call.1} parent=35 // pred_check_branch
        %570 = sbr.rel (%p568) target = $region40
      $region39: #{tpu_custom_call.1} parent=35 // pred_region
        %s571 = smul.u32 4, %s19
        %s572 = smul.u32 2, %s20
      $region40: #{tpu_custom_call.1} parent=35 // pred_fallthru
        _
    $region36: #{tpu_custom_call.1} parent=5 // pred_fallthru
      _
    %p573 = scmp.le.s32.totalorder 2, %s10
    // Predicated region
    $region41: #{tpu_custom_call.1} parent=5 // pred_check
      %p574 = pneg %p573
    $region42: #{tpu_custom_call.1} parent=5 // pred_check_branch
      %576 = sbr.rel (%p574) target = $region44
    $region43: #{tpu_custom_call.1} parent=5 // pred_region
      %s577 = ssub.s32 %s10, 2
      // Predicated region
      $region45: #{tpu_custom_call.1} parent=43 // pred_check
        %p578 = pneg %p157
      $region46: #{tpu_custom_call.1} parent=43 // pred_check_branch
        %580 = sbr.rel (%p578) target = $region48
      $region47: #{tpu_custom_call.1} parent=43 // pred_region
        %s581 = smul.u32 4, %s21
        %s582 = smul.u32 2, %s22
        %p583 = scmp.lt.s32.totalorder %s581, 15
        %s584 = scalar_select %p583, %s581, 15
        %p585 = scmp.lt.s32.totalorder %s582, 1
        %s586 = scalar_select %p585, %s582, 1
        %s587 = smul.addr %s584, 2
        %s588 = sadd.s32 %s586, %s587
        %s589 = smul.addr %s588, 8
        %s590 = scalar_lea.vmem %s4, %s589
      $region48: #{tpu_custom_call.1} parent=43 // pred_fallthru
        _
    $region44: #{tpu_custom_call.1} parent=5 // pred_fallthru
      _
  $region6: #{tpu_custom_call.1} parent=0 // loop_footer
    %s14 = sadd.s32 1, %s10
  $region7: #{tpu_custom_call.1} parent=0 // loop_footer_branch
    %9 = sbr.rel target = $region3
  $region8: #{tpu_custom_call.1} parent=0 // loop_exit
    _

</llo_original>
